<compile_context>
chip_gen: v6e
topology: v6e:2x2x1
jax: 0.10.0
libtpu: 0.0.40
codegen_flags: <defaults>
</compile_context>

<pallas_src>
import jax
import jax.numpy as jnp
from jax.experimental import pallas as pl
from jax.experimental.pallas import tpu as pltpu


# ----------------------------------------------------------------------------
# Kernels
# ----------------------------------------------------------------------------
def _ffn_resident_kernel(x_ref, w1_ref, b1_ref, w2_ref, b2_ref, o_ref):
    # x_ref:  (tm, d_model) f32 tile of token rows
    # w1_ref: (d_model, d_ff) bf16, fully resident
    # b1_ref: (1, d_ff) f32
    # w2_ref: (d_ff, d_model) bf16, fully resident
    # b2_ref: (1, d_model) f32
    x = x_ref[...].astype(jnp.bfloat16)                      # bf16 MXU operand
    h = jnp.dot(x, w1_ref[...], preferred_element_type=jnp.float32)
    h = jnp.maximum(h + b1_ref[...], 0.0)                    # bias + ReLU in f32 (VPU)
    # dropout == identity (inference)
    y = jnp.dot(h.astype(jnp.bfloat16), w2_ref[...],
                preferred_element_type=jnp.float32)
    o_ref[...] = (y + b2_ref[...]).astype(o_ref.dtype)


def _ffn_dff_tiled_kernel(x_ref, w1_ref, b1_ref, w2_ref, b2_ref, o_ref, acc_ref):
    # Grid = (row tiles, d_ff tiles); axis 1 is the reduction for the 2nd matmul.
    j = pl.program_id(1)

    @pl.when(j == 0)
    def _():
        acc_ref[...] = jnp.zeros_like(acc_ref)

    x = x_ref[...].astype(jnp.bfloat16)
    h = jnp.dot(x, w1_ref[...], preferred_element_type=jnp.float32)
    h = jnp.maximum(h + b1_ref[...], 0.0)
    # dropout == identity (inference)
    acc_ref[...] += jnp.dot(h.astype(jnp.bfloat16), w2_ref[...],
                            preferred_element_type=jnp.float32)

    @pl.when(j == pl.num_programs(1) - 1)
    def _():
        o_ref[...] = (acc_ref[...] + b2_ref[...]).astype(o_ref.dtype)


# ----------------------------------------------------------------------------
# Wrapper
# ----------------------------------------------------------------------------
def _round_up(n, m):
    return ((n + m - 1) // m) * m


def _pick_tf(d_ff, tf):
    """Largest multiple of 128 that divides d_ff and is <= tf (else full d_ff)."""
    if d_ff <= tf or d_ff % 128 != 0:
        return d_ff
    t = max((tf // 128) * 128, 128)
    while t >= 128 and d_ff % t:
        t -= 128
    return t if t >= 128 else d_ff


def _resident_call(x2, w1, b1_2, w2, b2_2, tm, vmem_limit, cost,
                   single_buffer_weights):
    n_pad, d_model = x2.shape
    d_ff = w1.shape[1]
    # Constant index_map => multi-buffering the weights buys nothing; ask for 1 buffer.
    wkw = dict(pipeline_mode=pl.Buffered(1)) if single_buffer_weights else {}
    grid_spec = pltpu.PrefetchScalarGridSpec(
        num_scalar_prefetch=0,
        grid=(n_pad // tm,),
        in_specs=[
            pl.BlockSpec((tm, d_model), lambda i: (i, 0)),            # x rows
            pl.BlockSpec((d_model, d_ff), lambda i: (0, 0), **wkw),   # W1 (full)
            pl.BlockSpec((1, d_ff), lambda i: (0, 0), **wkw),         # b1
            pl.BlockSpec((d_ff, d_model), lambda i: (0, 0), **wkw),   # W2 (full)
            pl.BlockSpec((1, d_model), lambda i: (0, 0), **wkw),      # b2
        ],
        out_specs=pl.BlockSpec((tm, d_model), lambda i: (i, 0)),
    )
    return pl.pallas_call(
        _ffn_resident_kernel,
        out_shape=jax.ShapeDtypeStruct((n_pad, d_model), x2.dtype),
        grid_spec=grid_spec,
        compiler_params=pltpu.CompilerParams(
            dimension_semantics=("parallel",),
            vmem_limit_bytes=vmem_limit),
        cost_estimate=cost,
    )(x2, w1, b1_2, w2, b2_2)


def _tiled_call(x2, w1, b1_2, w2, b2_2, tm, tf, vmem_limit, cost):
    n_pad, d_model = x2.shape
    d_ff = w1.shape[1]
    grid_spec = pltpu.PrefetchScalarGridSpec(
        num_scalar_prefetch=0,
        grid=(n_pad // tm, d_ff // tf),
        in_specs=[
            pl.BlockSpec((tm, d_model), lambda i, j: (i, 0)),         # x rows
            pl.BlockSpec((d_model, tf), lambda i, j: (0, j)),         # W1 column slab
            pl.BlockSpec((1, tf), lambda i, j: (0, j)),               # b1 slab
            pl.BlockSpec((tf, d_model), lambda i, j: (j, 0)),         # W2 row slab
            pl.BlockSpec((1, d_model), lambda i, j: (0, 0)),          # b2
        ],
        out_specs=pl.BlockSpec((tm, d_model), lambda i, j: (i, 0)),
        scratch_shapes=[pltpu.VMEM((tm, d_model), jnp.float32)],      # f32 accumulator
    )
    return pl.pallas_call(
        _ffn_dff_tiled_kernel,
        out_shape=jax.ShapeDtypeStruct((n_pad, d_model), x2.dtype),
        grid_spec=grid_spec,
        compiler_params=pltpu.CompilerParams(
            dimension_semantics=("parallel", "arbitrary"),
            vmem_limit_bytes=vmem_limit),
        cost_estimate=cost,
    )(x2, w1, b1_2, w2, b2_2)


def positionwise_feed_forward(x, w1, b1, w2, b2, *, tm=256, tf=2048,
                              force_dff_tiling=False):
    """x: [B, S, d_model] f32.  w1: [d_model, d_ff], w2: [d_ff, d_model] (pre-transposed)."""
    B, S, d_model = x.shape
    d_ff = w1.shape[1]
    N = B * S

    # bf16 weights feed the MXU at full rate; biases stay f32 for VPU adds.
    w1b = w1.astype(jnp.bfloat16)
    w2b = w2.astype(jnp.bfloat16)
    b1_2 = b1.reshape(1, d_ff).astype(jnp.float32)
    b2_2 = b2.reshape(1, d_model).astype(jnp.float32)

    # Row tile: large for MXU occupancy, clamped for tiny inputs, multiple of 8.
    tm_eff = _round_up(max(8, min(tm, _round_up(N, 8))), 8)
    n_pad = _round_up(N, tm_eff)
    x2 = x.reshape(N, d_model)
    if n_pad != N:
        x2 = jnp.pad(x2, ((0, n_pad - N), (0, 0)))

    # Working-set estimates (bytes).
    x_tile = tm_eff * d_model * 4
    out_tile = tm_eff * d_model * 4
    h_tile = tm_eff * d_ff * 4
    resident_need = ((w1b.size + w2b.size) * 2 + (b1_2.size + b2_2.size) * 4
                     + 2 * (x_tile + out_tile) + 2 * h_tile)

    VMEM_BUDGET = 48 * 1024 * 1024  # conservative: fits v7x's 64 MiB/TC with headroom
    use_resident = (resident_need <= VMEM_BUDGET) and not force_dff_tiling

    flops = int(4 * n_pad * d_model * d_ff)  # two matmuls, 2*M*K*N each
    bytes_accessed = int(n_pad * d_model * 4 * 2
                         + (w1b.size + w2b.size) * 2
                         + (d_ff + d_model) * 4)
    cost = pl.CostEstimate(flops=flops, transcendentals=0,
                           bytes_accessed=bytes_accessed)

    if use_resident:
        vmem_limit = int(min(max(resident_need * 3 // 2, 32 * 1024 * 1024),
                             64 * 1024 * 1024))
        try:
            return _resident_call(x2, w1b, b1_2, w2b, b2_2, tm_eff, vmem_limit,
                                  cost, single_buffer_weights=True
                                  )[:N].reshape(B, S, d_model)
        except Exception:
            # pipeline_mode=pl.Buffered(1) not supported by this build: fall back
            # to default (double) buffering of the weight operands.
            return _resident_call(x2, w1b, b1_2, w2b, b2_2, tm_eff, vmem_limit,
                                  cost, single_buffer_weights=False
                                  )[:N].reshape(B, S, d_model)

    # Large-weight path: tile d_ff as a reduction axis, keep only slabs resident.
    tf_eff = _pick_tf(d_ff, tf)
    tiled_need = (2 * (d_model * tf_eff * 2 + tf_eff * d_model * 2 + tf_eff * 4)
                  + 2 * (x_tile + out_tile) + out_tile + 2 * tm_eff * tf_eff * 4)
    vmem_limit = int(min(max(tiled_need * 3 // 2, 32 * 1024 * 1024),
                         64 * 1024 * 1024))
    out = _tiled_call(x2, w1b, b1_2, w2b, b2_2, tm_eff, tf_eff, vmem_limit, cost)
    return out[:N].reshape(B, S, d_model)


# ----------------------------------------------------------------------------
# Params (mirrors nn.Linear default init, stored pre-transposed [in, out])
# ----------------------------------------------------------------------------
def init_params(key, d_model):
    d_ff = d_model * 4
    k1, k2, k3, k4 = jax.random.split(key, 4)
    lim1 = 1.0 / (d_model ** 0.5)
    lim2 = 1.0 / (d_ff ** 0.5)
    w1 = jax.random.uniform(k1, (d_model, d_ff), jnp.float32, -lim1, lim1)
    b1 = jax.random.uniform(k2, (d_ff,), jnp.float32, -lim1, lim1)
    w2 = jax.random.uniform(k3, (d_ff, d_model), jnp.float32, -lim2, lim2)
    b2 = jax.random.uniform(k4, (d_model,), jnp.float32, -lim2, lim2)
    return w1, b1, w2, b2


if __name__ == "__main__":
    key = jax.random.PRNGKey(0)

    # --- primary (resident-weights) path ------------------------------------
    B, S, d_model = 2, 8, 32
    kx, kp, kx2, kp2 = jax.random.split(key, 4)
    x = jax.random.normal(kx, (B, S, d_model), jnp.float32)
    w1, b1, w2, b2 = init_params(kp, d_model)

    y = positionwise_feed_forward(x, w1, b1, w2, b2)
    y = jax.block_until_ready(y)

    # f32 reference; kernel uses bf16 MXU operands with f32 accumulation,
    # so tolerance is loosened accordingly.
    h_ref = jnp.maximum(x.reshape(-1, d_model) @ w1 + b1, 0.0)
    y_ref = (h_ref @ w2 + b2).reshape(B, S, d_model)
    assert jnp.allclose(y, y_ref, atol=5e-2, rtol=5e-2), \
        "mismatch vs reference (resident path)"

    # --- d_ff-tiled reduction path (used for large models / v7x) ------------
    d_model2 = 64
    x2 = jax.random.normal(kx2, (B, S, d_model2), jnp.float32)
    p2 = init_params(kp2, d_model2)
    y2 = positionwise_feed_forward(x2, *p2, tf=128, force_dff_tiling=True)
    y2 = jax.block_until_ready(y2)
    h2_ref = jnp.maximum(x2.reshape(-1, d_model2) @ p2[0] + p2[1], 0.0)
    y2_ref = (h2_ref @ p2[2] + p2[3]).reshape(B, S, d_model2)
    assert jnp.allclose(y2, y2_ref, atol=5e-2, rtol=5e-2), \
        "mismatch vs reference (d_ff-tiled path)"

    print("KERNEL_OK")
</pallas_src>

<mosaic_0001>
module attributes {stable_mosaic.version = 11 : i64} {
  func.func @_ffn_resident_kernel(%arg0: i32, %arg1: memref<16x32xf32, #tpu.memory_space<vmem>>, %arg2: memref<32x128xbf16, #tpu.memory_space<vmem>>, %arg3: memref<1x128xf32, #tpu.memory_space<vmem>>, %arg4: memref<128x32xbf16, #tpu.memory_space<vmem>>, %arg5: memref<1x32xf32, #tpu.memory_space<vmem>>, %arg6: memref<16x32xf32, #tpu.memory_space<vmem>>) attributes {dimension_semantics = [#tpu.dimension_semantics<parallel>], iteration_bounds = array<i64: 1>, scalar_prefetch = 0 : i64, scratch_operands = 0 : i64, tpu.core_type = #tpu.core_type<tc>, window_params = [{transform_indices = @transform_0, window_bounds = array<i64: 16, 32>}, {pipeline_mode = #tpu.pipeline_mode<synchronous>, transform_indices = @transform_1, window_bounds = array<i64: 32, 128>}, {pipeline_mode = #tpu.pipeline_mode<synchronous>, transform_indices = @transform_2, window_bounds = array<i64: 1, 128>}, {pipeline_mode = #tpu.pipeline_mode<synchronous>, transform_indices = @transform_3, window_bounds = array<i64: 128, 32>}, {pipeline_mode = #tpu.pipeline_mode<synchronous>, transform_indices = @transform_4, window_bounds = array<i64: 1, 32>}, {transform_indices = @transform_5, window_bounds = array<i64: 16, 32>}]} {
    %c0 = arith.constant 0 : index
    %c0_0 = arith.constant 0 : index
    %0 = vector.load %arg1[%c0, %c0_0] : memref<16x32xf32, #tpu.memory_space<vmem>>, vector<16x32xf32>
    %1 = arith.truncf %0 : vector<16x32xf32> to vector<16x32xbf16>
    %c0_1 = arith.constant 0 : index
    %c0_2 = arith.constant 0 : index
    %2 = vector.load %arg2[%c0_1, %c0_2] : memref<32x128xbf16, #tpu.memory_space<vmem>>, vector<32x128xbf16>
    %cst = arith.constant dense<0.000000e+00> : vector<16x128xf32>
    %3 = tpu.matmul %1, %2, %cst {dimension_numbers = #tpu.dot_dimension_numbers<[1], [0], [0], [1], [0, 0, 1, 1], [], []>} : vector<16x32xbf16>, vector<32x128xbf16>, vector<16x128xf32> -> vector<16x128xf32>
    %c0_3 = arith.constant 0 : index
    %c0_4 = arith.constant 0 : index
    %4 = vector.load %arg3[%c0_3, %c0_4] : memref<1x128xf32, #tpu.memory_space<vmem>>, vector<1x128xf32>
    %5 = vector.broadcast %4 : vector<1x128xf32> to vector<16x128xf32>
    %6 = arith.addf %3, %5 : vector<16x128xf32>
    %cst_5 = arith.constant 0.000000e+00 : f32
    %7 = vector.broadcast %cst_5 : f32 to vector<16x128xf32>
    %8 = arith.maximumf %6, %7 : vector<16x128xf32>
    %9 = arith.truncf %8 : vector<16x128xf32> to vector<16x128xbf16>
    %c0_6 = arith.constant 0 : index
    %c0_7 = arith.constant 0 : index
    %10 = vector.load %arg4[%c0_6, %c0_7] : memref<128x32xbf16, #tpu.memory_space<vmem>>, vector<128x32xbf16>
    %cst_8 = arith.constant dense<0.000000e+00> : vector<16x32xf32>
    %11 = tpu.matmul %9, %10, %cst_8 {dimension_numbers = #tpu.dot_dimension_numbers<[1], [0], [0], [1], [0, 0, 1, 1], [], []>} : vector<16x128xbf16>, vector<128x32xbf16>, vector<16x32xf32> -> vector<16x32xf32>
    %c0_9 = arith.constant 0 : index
    %c0_10 = arith.constant 0 : index
    %12 = vector.load %arg5[%c0_9, %c0_10] : memref<1x32xf32, #tpu.memory_space<vmem>>, vector<1x32xf32>
    %13 = vector.broadcast %12 : vector<1x32xf32> to vector<16x32xf32>
    %14 = arith.addf %11, %13 : vector<16x32xf32>
    %c0_11 = arith.constant 0 : index
    %c0_12 = arith.constant 0 : index
    %15 = vector.load %arg6[%c0_11, %c0_12] : memref<16x32xf32, #tpu.memory_space<vmem>>, vector<16x32xf32>
    tpu.vector_store %arg6[%c0_11, %c0_12], %14 {strides = array<i32>} : memref<16x32xf32, #tpu.memory_space<vmem>>, vector<16x32xf32>,
    return
  }
  func.func @transform_0(%arg0: i32) -> (i32, i32) {
    %c0_i32 = arith.constant 0 : i32
    %c0_i32_0 = arith.constant 0 : i32
    return %arg0, %c0_i32 : i32, i32
  }
  func.func @transform_1(%arg0: i32) -> (i32, i32) {
    %c0_i32 = arith.constant 0 : i32
    %c0_i32_0 = arith.constant 0 : i32
    %c0_i32_1 = arith.constant 0 : i32
    return %c0_i32, %c0_i32_0 : i32, i32
  }
  func.func @transform_2(%arg0: i32) -> (i32, i32) {
    %c0_i32 = arith.constant 0 : i32
    %c0_i32_0 = arith.constant 0 : i32
    %c0_i32_1 = arith.constant 0 : i32
    return %c0_i32, %c0_i32_0 : i32, i32
  }
  func.func @transform_3(%arg0: i32) -> (i32, i32) {
    %c0_i32 = arith.constant 0 : i32
    %c0_i32_0 = arith.constant 0 : i32
    %c0_i32_1 = arith.constant 0 : i32
    return %c0_i32, %c0_i32_0 : i32, i32
  }
  func.func @transform_4(%arg0: i32) -> (i32, i32) {
    %c0_i32 = arith.constant 0 : i32
    %c0_i32_0 = arith.constant 0 : i32
    %c0_i32_1 = arith.constant 0 : i32
    return %c0_i32, %c0_i32_0 : i32, i32
  }
  func.func @transform_5(%arg0: i32) -> (i32, i32) {
    %c0_i32 = arith.constant 0 : i32
    %c0_i32_0 = arith.constant 0 : i32
    return %arg0, %c0_i32 : i32, i32
  }
}

module attributes {stable_mosaic.version = 11 : i64} {
  func.func @_ffn_resident_kernel(%arg0: i32, %arg1: memref<16x32xf32, #tpu.memory_space<vmem>>, %arg2: memref<32x128xbf16, #tpu.memory_space<vmem>>, %arg3: memref<1x128xf32, #tpu.memory_space<vmem>>, %arg4: memref<128x32xbf16, #tpu.memory_space<vmem>>, %arg5: memref<1x32xf32, #tpu.memory_space<vmem>>, %arg6: memref<16x32xf32, #tpu.memory_space<vmem>>) attributes {dimension_semantics = [#tpu.dimension_semantics<parallel>], iteration_bounds = array<i64: 1>, scalar_prefetch = 0 : i64, scratch_operands = 0 : i64, tpu.core_type = #tpu.core_type<tc>, window_params = [{transform_indices = @transform_0, window_bounds = array<i64: 16, 32>}, {pipeline_mode = #tpu.pipeline_mode<synchronous>, transform_indices = @transform_1, window_bounds = array<i64: 32, 128>}, {pipeline_mode = #tpu.pipeline_mode<synchronous>, transform_indices = @transform_2, window_bounds = array<i64: 1, 128>}, {pipeline_mode = #tpu.pipeline_mode<synchronous>, transform_indices = @transform_3, window_bounds = array<i64: 128, 32>}, {pipeline_mode = #tpu.pipeline_mode<synchronous>, transform_indices = @transform_4, window_bounds = array<i64: 1, 32>}, {transform_indices = @transform_5, window_bounds = array<i64: 16, 32>}]} {
    %c0 = arith.constant 0 : index
    %c0_0 = arith.constant 0 : index
    %0 = vector.load %arg1[%c0, %c0_0] : memref<16x32xf32, #tpu.memory_space<vmem>>, vector<16x32xf32>
    %1 = arith.truncf %0 : vector<16x32xf32> to vector<16x32xbf16>
    %c0_1 = arith.constant 0 : index
    %c0_2 = arith.constant 0 : index
    %2 = vector.load %arg2[%c0_1, %c0_2] : memref<32x128xbf16, #tpu.memory_space<vmem>>, vector<32x128xbf16>
    %cst = arith.constant dense<0.000000e+00> : vector<16x128xf32>
    %3 = tpu.matmul %1, %2, %cst {dimension_numbers = #tpu.dot_dimension_numbers<[1], [0], [0], [1], [0, 0, 1, 1], [], []>} : vector<16x32xbf16>, vector<32x128xbf16>, vector<16x128xf32> -> vector<16x128xf32>
    %c0_3 = arith.constant 0 : index
    %c0_4 = arith.constant 0 : index
    %4 = vector.load %arg3[%c0_3, %c0_4] : memref<1x128xf32, #tpu.memory_space<vmem>>, vector<1x128xf32>
    %5 = vector.broadcast %4 : vector<1x128xf32> to vector<16x128xf32>
    %6 = arith.addf %3, %5 : vector<16x128xf32>
    %cst_5 = arith.constant 0.000000e+00 : f32
    %7 = vector.broadcast %cst_5 : f32 to vector<16x128xf32>
    %8 = arith.maximumf %6, %7 : vector<16x128xf32>
    %9 = arith.truncf %8 : vector<16x128xf32> to vector<16x128xbf16>
    %c0_6 = arith.constant 0 : index
    %c0_7 = arith.constant 0 : index
    %10 = vector.load %arg4[%c0_6, %c0_7] : memref<128x32xbf16, #tpu.memory_space<vmem>>, vector<128x32xbf16>
    %cst_8 = arith.constant dense<0.000000e+00> : vector<16x32xf32>
    %11 = tpu.matmul %9, %10, %cst_8 {dimension_numbers = #tpu.dot_dimension_numbers<[1], [0], [0], [1], [0, 0, 1, 1], [], []>} : vector<16x128xbf16>, vector<128x32xbf16>, vector<16x32xf32> -> vector<16x32xf32>
    %c0_9 = arith.constant 0 : index
    %c0_10 = arith.constant 0 : index
    %12 = vector.load %arg5[%c0_9, %c0_10] : memref<1x32xf32, #tpu.memory_space<vmem>>, vector<1x32xf32>
    %13 = vector.broadcast %12 : vector<1x32xf32> to vector<16x32xf32>
    %14 = arith.addf %11, %13 : vector<16x32xf32>
    %c0_11 = arith.constant 0 : index
    %c0_12 = arith.constant 0 : index
    %15 = vector.load %arg6[%c0_11, %c0_12] : memref<16x32xf32, #tpu.memory_space<vmem>>, vector<16x32xf32>
    tpu.vector_store %arg6[%c0_11, %c0_12], %14 {strides = array<i32>} : memref<16x32xf32, #tpu.memory_space<vmem>>, vector<16x32xf32>,
    return
  }
  func.func @transform_0(%arg0: i32) -> (i32, i32) {
    %c0_i32 = arith.constant 0 : i32
    %c0_i32_0 = arith.constant 0 : i32
    return %arg0, %c0_i32 : i32, i32
  }
  func.func @transform_1(%arg0: i32) -> (i32, i32) {
    %c0_i32 = arith.constant 0 : i32
    %c0_i32_0 = arith.constant 0 : i32
    %c0_i32_1 = arith.constant 0 : i32
    return %c0_i32, %c0_i32_0 : i32, i32
  }
  func.func @transform_2(%arg0: i32) -> (i32, i32) {
    %c0_i32 = arith.constant 0 : i32
    %c0_i32_0 = arith.constant 0 : i32
    %c0_i32_1 = arith.constant 0 : i32
    return %c0_i32, %c0_i32_0 : i32, i32
  }
  func.func @transform_3(%arg0: i32) -> (i32, i32) {
    %c0_i32 = arith.constant 0 : i32
    %c0_i32_0 = arith.constant 0 : i32
    %c0_i32_1 = arith.constant 0 : i32
    return %c0_i32, %c0_i32_0 : i32, i32
  }
  func.func @transform_4(%arg0: i32) -> (i32, i32) {
    %c0_i32 = arith.constant 0 : i32
    %c0_i32_0 = arith.constant 0 : i32
    %c0_i32_1 = arith.constant 0 : i32
    return %c0_i32, %c0_i32_0 : i32, i32
  }
  func.func @transform_5(%arg0: i32) -> (i32, i32) {
    %c0_i32 = arith.constant 0 : i32
    %c0_i32_0 = arith.constant 0 : i32
    return %arg0, %c0_i32 : i32, i32
  }
}

</mosaic_0001>

<llo_original>
// kernel: tpu_custom_call.1
$region0: #{tpu_custom_call.1}
  #allocation0 [shape = 'u32[]', space=smem, size = 0x4, offset = 0x4, fixed_abs, tag = 'smem constant byte address 0x4 - core index']
  #allocation1 [shape = 'u32[144,128]{1,0:T(1,128)}', space=vmem, size = 0x12000, scoped, tag = 'internal scratch']
  %s0 = inlined_call_operand.vmem [shape: f32[16,32], index: 0, kind: input, shape index: {}]
  %s1 = inlined_call_operand.vmem [shape: bf16[32,128], index: 1, kind: input, shape index: {}]
  %s2 = inlined_call_operand.vmem [shape: f32[1,128], index: 2, kind: input, shape index: {}]
  %s3 = inlined_call_operand.vmem [shape: bf16[128,32], index: 3, kind: input, shape index: {}]
  %s4 = inlined_call_operand.vmem [shape: f32[1,32], index: 4, kind: input, shape index: {}]
  %s5 = inlined_call_operand.hbm [shape: f32[16,32], index: 5, kind: output, shape index: {}]
  %s6 = sld [smem:[#allocation0]]
  $region30: #{tpu_custom_call.1} parent=0
    _
  %s8 = ssub.s32 1, %s6
  %s9 = scalar_select 0, %s8, %s6
  $region1: #{tpu_custom_call.1} parent=0
    #allocation2 [shape = 'u8[8192]{0}', space=vmem, size = 0x2000, scoped, tag = 'output window, operand 0, single buffered']
    #allocation3 [shape = 's32[1]{0}', space=sflag, size = 0x4, scoped, tag = 'scoped memory for tpu_custom_call.1']
    %10 = vsyncpa [#allocation3], 0
    // Predicated region
    $region2: #{tpu_custom_call.1} parent=1 // pred_check
      _
    $region3: #{tpu_custom_call.1} parent=1 // pred_check_branch
      %12 = sbr.rel (0) target = $region5
    $region4: #{tpu_custom_call.1} parent=1 // pred_region
      _
    $region5: #{tpu_custom_call.1} parent=1 // pred_fallthru
      _
    // Predicated region
    $region6: #{tpu_custom_call.1} parent=1 // pred_check
      _
    $region7: #{tpu_custom_call.1} parent=1 // pred_check_branch
      %14 = sbr.rel (0) target = $region9
    $region8: #{tpu_custom_call.1} parent=1 // pred_region
      _
    $region9: #{tpu_custom_call.1} parent=1 // pred_fallthru
      _
    // Predicated region
    $region10: #{tpu_custom_call.1} parent=1 // pred_check
      _
    $region11: #{tpu_custom_call.1} parent=1 // pred_check_branch
      %16 = sbr.rel (0) target = $region13
    $region12: #{tpu_custom_call.1} parent=1 // pred_region
      _
    $region13: #{tpu_custom_call.1} parent=1 // pred_fallthru
      _
    // Predicated region
    $region14: #{tpu_custom_call.1} parent=1 // pred_check
      _
    $region15: #{tpu_custom_call.1} parent=1 // pred_check_branch
      %18 = sbr.rel (0) target = $region17
    $region16: #{tpu_custom_call.1} parent=1 // pred_region
      _
    $region17: #{tpu_custom_call.1} parent=1 // pred_fallthru
      _
    // Predicated region
    $region18: #{tpu_custom_call.1} parent=1 // pred_check
      _
    $region19: #{tpu_custom_call.1} parent=1 // pred_check_branch
      %20 = sbr.rel (0) target = $region21
    $region20: #{tpu_custom_call.1} parent=1 // pred_region
      _
    $region21: #{tpu_custom_call.1} parent=1 // pred_fallthru
      _
    %v22 = vld [vmem:[%s0] sm:$0xff]
    %v23 = vld [vmem:[%s0 + $0x8] sm:$0xff]
    %v24 = vpack.c.bf16 %v23, %v22
    %v25 = vld [vmem:[%s1] sm:$0xf]
    %v26 = vld [vmem:[%s1 + $0x4] sm:$0xf]
    %v27 = vld [vmem:[%s1 + $0x8] sm:$0xf]
    %v28 = vld [vmem:[%s1 + $0xc] sm:$0xf]
    %v29 = vld [vmem:[%s2] sm:$0x1]
    %v31 = vlaneseq
    %v32 = vshrl.u32 %v31, 7
    %v33 = vsub.s32 0, %v32
    %v34 = vrot.slane %v29, %v33
    %v40 = vunpack.c.l.b16 %v25
    %v41 = vunpack.c.l.b16 %v26
    %v42 = vunpack.c.l.b16 %v27
    %v43 = vunpack.c.l.b16 %v28
    %v44 = vpack.c.b16 %v41, %v40
    %v45 = vpack.c.b16 %v43, %v42
    %vm48 = vcmask 261120
    %v50 = vsel %vm48, %v24, 0
    %52 = vmatprep.subr.bf16.mxu0 0
    %53 = vmatpush1.bf16.msra.mxu0 0
    %54 = vmatprep.subr.bf16.mxu0 0
    %55 = vmatpush1.bf16.msra.mxu0 0
    %56 = vmatprep.subr.bf16.mxu0 0
    %57 = vmatpush1.bf16.msra.mxu0 0
    %58 = vmatprep.subr.bf16.mxu0 0
    %59 = vmatpush1.bf16.msra.mxu0 0
    %60 = vmatprep.subr.bf16.mxu0 0
    %61 = vmatpush1.bf16.msra.mxu0 0
    %62 = vmatprep.subr.bf16.mxu0 0
    %63 = vmatpush1.bf16.msra.mxu0 0
    %64 = vmatprep.subr.bf16.mxu0 0
    %65 = vmatpush1.bf16.msra.mxu0 %v45
    %66 = vmatprep.subr.bf16.mxu0 0
    %67 = vmatpush1.bf16.msra.mxu0 %v44
    %68 = vmatprep.subr.bf16.mxu0 0
    %69 = vmatpush2.bf16.msra.mxu0 0
    %70 = vmatprep.subr.bf16.mxu0 0
    %71 = vmatpush2.bf16.msra.mxu0 0
    %72 = vmatprep.subr.bf16.mxu0 0
    %73 = vmatpush2.bf16.msra.mxu0 0
    %74 = vmatprep.subr.bf16.mxu0 0
    %75 = vmatpush2.bf16.msra.mxu0 0
    %76 = vmatprep.subr.bf16.mxu0 0
    %77 = vmatpush2.bf16.msra.mxu0 0
    %78 = vmatprep.subr.bf16.mxu0 0
    %79 = vmatpush2.bf16.msra.mxu0 0
    %80 = vmatprep.subr.bf16.mxu0 0
    %81 = vmatpush2.bf16.msra.mxu0 0
    %82 = vmatprep.subr.bf16.mxu0 0
    %83 = vmatpush2.bf16.msra.mxu0 0
    %84 = vmatprep.mubr.bf16.mxu0 0
    %85 = vmatmul.mubr.bf16.gmra.mxu0 %v50
    %v86 = vpop.f32.mrf.mxu0
    %v87 = vadd.f32 %v34, %v86
    %v88 = vpop.f32.mrf.mxu0
    %v89 = vpop.f32.mrf.mxu0
    %v90 = vadd.f32 %v34, %v89
    %v91 = vpop.f32.mrf.mxu0
    %92 = vdwg.mxu0
    %v93 = vmax.f32 %v87, 0.0
    %v94 = vmax.f32 %v90, 0.0
    %v95 = vpack.c.bf16 %v94, %v93
    %v96 = vld [vmem:[%s3] sm:$0xf]
    %v97 = vld [vmem:[%s3 + $0x4] sm:$0xf]
    %v98 = vld [vmem:[%s3 + $0x8] sm:$0xf]
    %v99 = vld [vmem:[%s3 + $0xc] sm:$0xf]
    %v100 = vld [vmem:[%s3 + $0x10] sm:$0xf]
    %v101 = vld [vmem:[%s3 + $0x14] sm:$0xf]
    %v102 = vld [vmem:[%s3 + $0x18] sm:$0xf]
    %v103 = vld [vmem:[%s3 + $0x1c] sm:$0xf]
    %v104 = vld [vmem:[%s3 + $0x20] sm:$0xf]
    %v105 = vld [vmem:[%s3 + $0x24] sm:$0xf]
    %v106 = vld [vmem:[%s3 + $0x28] sm:$0xf]
    %v107 = vld [vmem:[%s3 + $0x2c] sm:$0xf]
    %v108 = vld [vmem:[%s3 + $0x30] sm:$0xf]
    %v109 = vld [vmem:[%s3 + $0x34] sm:$0xf]
    %v110 = vld [vmem:[%s3 + $0x38] sm:$0xf]
    %v111 = vld [vmem:[%s3 + $0x3c] sm:$0xf]
    %v112 = vld [vmem:[%s4] sm:$0x1]
    %v114 = vlaneseq
    %v115 = vshrl.u32 %v114, 7
    %v116 = vsub.s32 0, %v115
    %v117 = vrot.slane %v112, %v116
    %v135 = vunpack.c.l.b16 %v96
    %v136 = vunpack.c.l.b16 %v97
    %v137 = vunpack.c.l.b16 %v98
    %v138 = vunpack.c.l.b16 %v99
    %v139 = vunpack.c.l.b16 %v100
    %v140 = vunpack.c.l.b16 %v101
    %v141 = vunpack.c.l.b16 %v102
    %v142 = vunpack.c.l.b16 %v103
    %v143 = vunpack.c.l.b16 %v104
    %v144 = vunpack.c.l.b16 %v105
    %v145 = vunpack.c.l.b16 %v106
    %v146 = vunpack.c.l.b16 %v107
    %v147 = vunpack.c.l.b16 %v108
    %v148 = vunpack.c.l.b16 %v109
    %v149 = vunpack.c.l.b16 %v110
    %v150 = vunpack.c.l.b16 %v111
    %v151 = vpack.c.b16 %v136, %v135
    %v152 = vpack.c.b16 %v138, %v137
    %v153 = vpack.c.b16 %v140, %v139
    %v154 = vpack.c.b16 %v142, %v141
    %v155 = vpack.c.b16 %v144, %v143
    %v156 = vpack.c.b16 %v146, %v145
    %v157 = vpack.c.b16 %v148, %v147
    %v158 = vpack.c.b16 %v150, %v149
    %167 = vmatprep.subr.bf16.mxu0 0
    %168 = vmatpush1.bf16.msra.mxu0 %v158
    %169 = vmatprep.subr.bf16.mxu0 0
    %170 = vmatpush1.bf16.msra.mxu0 %v157
    %171 = vmatprep.subr.bf16.mxu0 0
    %172 = vmatpush1.bf16.msra.mxu0 %v156
    %173 = vmatprep.subr.bf16.mxu0 0
    %174 = vmatpush1.bf16.msra.mxu0 %v155
    %175 = vmatprep.subr.bf16.mxu0 0
    %176 = vmatpush1.bf16.msra.mxu0 %v154
    %177 = vmatprep.subr.bf16.mxu0 0
    %178 = vmatpush1.bf16.msra.mxu0 %v153
    %179 = vmatprep.subr.bf16.mxu0 0
    %180 = vmatpush1.bf16.msra.mxu0 %v152
    %181 = vmatprep.subr.bf16.mxu0 0
    %182 = vmatpush1.bf16.msra.mxu0 %v151
    %183 = vmatprep.subr.bf16.mxu0 0
    %184 = vmatpush2.bf16.msra.mxu0 0
    %185 = vmatprep.subr.bf16.mxu0 0
    %186 = vmatpush2.bf16.msra.mxu0 0
    %187 = vmatprep.subr.bf16.mxu0 0
    %188 = vmatpush2.bf16.msra.mxu0 0
    %189 = vmatprep.subr.bf16.mxu0 0
    %190 = vmatpush2.bf16.msra.mxu0 0
    %191 = vmatprep.subr.bf16.mxu0 0
    %192 = vmatpush2.bf16.msra.mxu0 0
    %193 = vmatprep.subr.bf16.mxu0 0
    %194 = vmatpush2.bf16.msra.mxu0 0
    %195 = vmatprep.subr.bf16.mxu0 0
    %196 = vmatpush2.bf16.msra.mxu0 0
    %197 = vmatprep.subr.bf16.mxu0 0
    %198 = vmatpush2.bf16.msra.mxu0 0
    %199 = vmatprep.mubr.bf16.mxu0 0
    %200 = vmatmul.mubr.bf16.gmra.mxu0 %v95
    %v201 = vpop.f32.mrf.mxu0
    %v202 = vadd.f32 %v117, %v201
    %v203 = vpop.f32.mrf.mxu0
    %v204 = vpop.f32.mrf.mxu0
    %v205 = vadd.f32 %v117, %v204
    %v206 = vpop.f32.mrf.mxu0
    %207 = vdwg.mxu0
    %208 = vst.msk [vmem:[#allocation2] sm:$0xff] %vm48, %v202
    %209 = vst.msk [vmem:[#allocation2 + $0x8] sm:$0xff] %vm48, %v205
    // Predicated region
    $region22: #{tpu_custom_call.1} parent=1 // pred_check
      _
    $region23: #{tpu_custom_call.1} parent=1 // pred_check_branch
      %211 = sbr.rel (0) target = $region25
    $region24: #{tpu_custom_call.1} parent=1 // pred_region
      %s213 = ssub.s32 256, 256
      %214 = vsyncadd [#allocation3], %s213
      %s215 = sshll.u32 [#allocation2], 4
      %s216 = int_to_ptr.vmem [resolvable:$true] %s215
      %221 = dma.vmem_to_hbm [thread:$0]  %s216, 256, %s5, [#allocation3], 128, 128, 8
    $region25: #{tpu_custom_call.1} parent=1 // pred_fallthru
      _
    // Predicated region
    $region26: #{tpu_custom_call.1} parent=1 // pred_check
      _
    $region27: #{tpu_custom_call.1} parent=1 // pred_check_branch
      %223 = sbr.rel (0) target = $region29
    $region28: #{tpu_custom_call.1} parent=1 // pred_region
      %224 = dma.done [#allocation3], 256
    $region29: #{tpu_custom_call.1} parent=1 // pred_fallthru
      _
    %225 = vsyncpa [#allocation3], 1

// kernel: tpu_custom_call.1
$region0: #{tpu_custom_call.1}
  #allocation0 [shape = 'u32[]', space=smem, size = 0x4, offset = 0x4, fixed_abs, tag = 'smem constant byte address 0x4 - core index']
  #allocation1 [shape = 'u32[144,128]{1,0:T(1,128)}', space=vmem, size = 0x12000, scoped, tag = 'internal scratch']
  %s0 = inlined_call_operand.vmem [shape: f32[16,32], index: 0, kind: input, shape index: {}]
  %s1 = inlined_call_operand.vmem [shape: bf16[32,128], index: 1, kind: input, shape index: {}]
  %s2 = inlined_call_operand.vmem [shape: f32[1,128], index: 2, kind: input, shape index: {}]
  %s3 = inlined_call_operand.vmem [shape: bf16[128,32], index: 3, kind: input, shape index: {}]
  %s4 = inlined_call_operand.vmem [shape: f32[1,32], index: 4, kind: input, shape index: {}]
  %s5 = inlined_call_operand.hbm [shape: f32[16,32], index: 5, kind: output, shape index: {}]
  %s6 = sld [smem:[#allocation0]]
  $region30: #{tpu_custom_call.1} parent=0
    _
  %s8 = ssub.s32 1, %s6
  %s9 = scalar_select 0, %s8, %s6
  $region1: #{tpu_custom_call.1} parent=0
    #allocation2 [shape = 'u8[8192]{0}', space=vmem, size = 0x2000, scoped, tag = 'output window, operand 0, single buffered']
    #allocation3 [shape = 's32[1]{0}', space=sflag, size = 0x4, scoped, tag = 'scoped memory for tpu_custom_call.1']
    %10 = vsyncpa [#allocation3], 0
    // Predicated region
    $region2: #{tpu_custom_call.1} parent=1 // pred_check
      _
    $region3: #{tpu_custom_call.1} parent=1 // pred_check_branch
      %12 = sbr.rel (0) target = $region5
    $region4: #{tpu_custom_call.1} parent=1 // pred_region
      _
    $region5: #{tpu_custom_call.1} parent=1 // pred_fallthru
      _
    // Predicated region
    $region6: #{tpu_custom_call.1} parent=1 // pred_check
      _
    $region7: #{tpu_custom_call.1} parent=1 // pred_check_branch
      %14 = sbr.rel (0) target = $region9
    $region8: #{tpu_custom_call.1} parent=1 // pred_region
      _
    $region9: #{tpu_custom_call.1} parent=1 // pred_fallthru
      _
    // Predicated region
    $region10: #{tpu_custom_call.1} parent=1 // pred_check
      _
    $region11: #{tpu_custom_call.1} parent=1 // pred_check_branch
      %16 = sbr.rel (0) target = $region13
    $region12: #{tpu_custom_call.1} parent=1 // pred_region
      _
    $region13: #{tpu_custom_call.1} parent=1 // pred_fallthru
      _
    // Predicated region
    $region14: #{tpu_custom_call.1} parent=1 // pred_check
      _
    $region15: #{tpu_custom_call.1} parent=1 // pred_check_branch
      %18 = sbr.rel (0) target = $region17
    $region16: #{tpu_custom_call.1} parent=1 // pred_region
      _
    $region17: #{tpu_custom_call.1} parent=1 // pred_fallthru
      _
    // Predicated region
    $region18: #{tpu_custom_call.1} parent=1 // pred_check
      _
    $region19: #{tpu_custom_call.1} parent=1 // pred_check_branch
      %20 = sbr.rel (0) target = $region21
    $region20: #{tpu_custom_call.1} parent=1 // pred_region
      _
    $region21: #{tpu_custom_call.1} parent=1 // pred_fallthru
      _
    %v22 = vld [vmem:[%s0] sm:$0xff]
    %v23 = vld [vmem:[%s0 + $0x8] sm:$0xff]
    %v24 = vpack.c.bf16 %v23, %v22
    %v25 = vld [vmem:[%s1] sm:$0xf]
    %v26 = vld [vmem:[%s1 + $0x4] sm:$0xf]
    %v27 = vld [vmem:[%s1 + $0x8] sm:$0xf]
    %v28 = vld [vmem:[%s1 + $0xc] sm:$0xf]
    %v29 = vld [vmem:[%s2] sm:$0x1]
    %v31 = vlaneseq
    %v32 = vshrl.u32 %v31, 7
    %v33 = vsub.s32 0, %v32
    %v34 = vrot.slane %v29, %v33
    %v40 = vunpack.c.l.b16 %v25
    %v41 = vunpack.c.l.b16 %v26
    %v42 = vunpack.c.l.b16 %v27
    %v43 = vunpack.c.l.b16 %v28
    %v44 = vpack.c.b16 %v41, %v40
    %v45 = vpack.c.b16 %v43, %v42
    %vm48 = vcmask 261120
    %v50 = vsel %vm48, %v24, 0
    %52 = vmatprep.subr.bf16.mxu0 0
    %53 = vmatpush1.bf16.msra.mxu0 0
    %54 = vmatprep.subr.bf16.mxu0 0
    %55 = vmatpush1.bf16.msra.mxu0 0
    %56 = vmatprep.subr.bf16.mxu0 0
    %57 = vmatpush1.bf16.msra.mxu0 0
    %58 = vmatprep.subr.bf16.mxu0 0
    %59 = vmatpush1.bf16.msra.mxu0 0
    %60 = vmatprep.subr.bf16.mxu0 0
    %61 = vmatpush1.bf16.msra.mxu0 0
    %62 = vmatprep.subr.bf16.mxu0 0
    %63 = vmatpush1.bf16.msra.mxu0 0
    %64 = vmatprep.subr.bf16.mxu0 0
    %65 = vmatpush1.bf16.msra.mxu0 %v45
    %66 = vmatprep.subr.bf16.mxu0 0
    %67 = vmatpush1.bf16.msra.mxu0 %v44
    %68 = vmatprep.subr.bf16.mxu0 0
    %69 = vmatpush2.bf16.msra.mxu0 0
    %70 = vmatprep.subr.bf16.mxu0 0
    %71 = vmatpush2.bf16.msra.mxu0 0
    %72 = vmatprep.subr.bf16.mxu0 0
    %73 = vmatpush2.bf16.msra.mxu0 0
    %74 = vmatprep.subr.bf16.mxu0 0
    %75 = vmatpush2.bf16.msra.mxu0 0
    %76 = vmatprep.subr.bf16.mxu0 0
    %77 = vmatpush2.bf16.msra.mxu0 0
    %78 = vmatprep.subr.bf16.mxu0 0
    %79 = vmatpush2.bf16.msra.mxu0 0
    %80 = vmatprep.subr.bf16.mxu0 0
    %81 = vmatpush2.bf16.msra.mxu0 0
    %82 = vmatprep.subr.bf16.mxu0 0
    %83 = vmatpush2.bf16.msra.mxu0 0
    %84 = vmatprep.mubr.bf16.mxu0 0
    %85 = vmatmul.mubr.bf16.gmra.mxu0 %v50
    %v86 = vpop.f32.mrf.mxu0
    %v87 = vadd.f32 %v34, %v86
    %v88 = vpop.f32.mrf.mxu0
    %v89 = vpop.f32.mrf.mxu0
    %v90 = vadd.f32 %v34, %v89
    %v91 = vpop.f32.mrf.mxu0
    %92 = vdwg.mxu0
    %v93 = vmax.f32 %v87, 0.0
    %v94 = vmax.f32 %v90, 0.0
    %v95 = vpack.c.bf16 %v94, %v93
    %v96 = vld [vmem:[%s3] sm:$0xf]
    %v97 = vld [vmem:[%s3 + $0x4] sm:$0xf]
    %v98 = vld [vmem:[%s3 + $0x8] sm:$0xf]
    %v99 = vld [vmem:[%s3 + $0xc] sm:$0xf]
    %v100 = vld [vmem:[%s3 + $0x10] sm:$0xf]
    %v101 = vld [vmem:[%s3 + $0x14] sm:$0xf]
    %v102 = vld [vmem:[%s3 + $0x18] sm:$0xf]
    %v103 = vld [vmem:[%s3 + $0x1c] sm:$0xf]
    %v104 = vld [vmem:[%s3 + $0x20] sm:$0xf]
    %v105 = vld [vmem:[%s3 + $0x24] sm:$0xf]
    %v106 = vld [vmem:[%s3 + $0x28] sm:$0xf]
    %v107 = vld [vmem:[%s3 + $0x2c] sm:$0xf]
    %v108 = vld [vmem:[%s3 + $0x30] sm:$0xf]
    %v109 = vld [vmem:[%s3 + $0x34] sm:$0xf]
    %v110 = vld [vmem:[%s3 + $0x38] sm:$0xf]
    %v111 = vld [vmem:[%s3 + $0x3c] sm:$0xf]
    %v112 = vld [vmem:[%s4] sm:$0x1]
    %v114 = vlaneseq
    %v115 = vshrl.u32 %v114, 7
    %v116 = vsub.s32 0, %v115
    %v117 = vrot.slane %v112, %v116
    %v135 = vunpack.c.l.b16 %v96
    %v136 = vunpack.c.l.b16 %v97
    %v137 = vunpack.c.l.b16 %v98
    %v138 = vunpack.c.l.b16 %v99
    %v139 = vunpack.c.l.b16 %v100
    %v140 = vunpack.c.l.b16 %v101
    %v141 = vunpack.c.l.b16 %v102
    %v142 = vunpack.c.l.b16 %v103
    %v143 = vunpack.c.l.b16 %v104
    %v144 = vunpack.c.l.b16 %v105
    %v145 = vunpack.c.l.b16 %v106
    %v146 = vunpack.c.l.b16 %v107
    %v147 = vunpack.c.l.b16 %v108
    %v148 = vunpack.c.l.b16 %v109
    %v149 = vunpack.c.l.b16 %v110
    %v150 = vunpack.c.l.b16 %v111
    %v151 = vpack.c.b16 %v136, %v135
    %v152 = vpack.c.b16 %v138, %v137
    %v153 = vpack.c.b16 %v140, %v139
    %v154 = vpack.c.b16 %v142, %v141
    %v155 = vpack.c.b16 %v144, %v143
    %v156 = vpack.c.b16 %v146, %v145
    %v157 = vpack.c.b16 %v148, %v147
    %v158 = vpack.c.b16 %v150, %v149
    %167 = vmatprep.subr.bf16.mxu0 0
    %168 = vmatpush1.bf16.msra.mxu0 %v158
    %169 = vmatprep.subr.bf16.mxu0 0
    %170 = vmatpush1.bf16.msra.mxu0 %v157
    %171 = vmatprep.subr.bf16.mxu0 0
    %172 = vmatpush1.bf16.msra.mxu0 %v156
    %173 = vmatprep.subr.bf16.mxu0 0
    %174 = vmatpush1.bf16.msra.mxu0 %v155
    %175 = vmatprep.subr.bf16.mxu0 0
    %176 = vmatpush1.bf16.msra.mxu0 %v154
    %177 = vmatprep.subr.bf16.mxu0 0
    %178 = vmatpush1.bf16.msra.mxu0 %v153
    %179 = vmatprep.subr.bf16.mxu0 0
    %180 = vmatpush1.bf16.msra.mxu0 %v152
    %181 = vmatprep.subr.bf16.mxu0 0
    %182 = vmatpush1.bf16.msra.mxu0 %v151
    %183 = vmatprep.subr.bf16.mxu0 0
    %184 = vmatpush2.bf16.msra.mxu0 0
    %185 = vmatprep.subr.bf16.mxu0 0
    %186 = vmatpush2.bf16.msra.mxu0 0
    %187 = vmatprep.subr.bf16.mxu0 0
    %188 = vmatpush2.bf16.msra.mxu0 0
    %189 = vmatprep.subr.bf16.mxu0 0
    %190 = vmatpush2.bf16.msra.mxu0 0
    %191 = vmatprep.subr.bf16.mxu0 0
    %192 = vmatpush2.bf16.msra.mxu0 0
    %193 = vmatprep.subr.bf16.mxu0 0
    %194 = vmatpush2.bf16.msra.mxu0 0
    %195 = vmatprep.subr.bf16.mxu0 0
    %196 = vmatpush2.bf16.msra.mxu0 0
    %197 = vmatprep.subr.bf16.mxu0 0
    %198 = vmatpush2.bf16.msra.mxu0 0
    %199 = vmatprep.mubr.bf16.mxu0 0
    %200 = vmatmul.mubr.bf16.gmra.mxu0 %v95
    %v201 = vpop.f32.mrf.mxu0
    %v202 = vadd.f32 %v117, %v201
    %v203 = vpop.f32.mrf.mxu0
    %v204 = vpop.f32.mrf.mxu0
    %v205 = vadd.f32 %v117, %v204
    %v206 = vpop.f32.mrf.mxu0
    %207 = vdwg.mxu0
    %208 = vst.msk [vmem:[#allocation2] sm:$0xff] %vm48, %v202
    %209 = vst.msk [vmem:[#allocation2 + $0x8] sm:$0xff] %vm48, %v205
    // Predicated region
    $region22: #{tpu_custom_call.1} parent=1 // pred_check
      _
    $region23: #{tpu_custom_call.1} parent=1 // pred_check_branch
      %211 = sbr.rel (0) target = $region25
    $region24: #{tpu_custom_call.1} parent=1 // pred_region
      %s213 = ssub.s32 256, 256
      %214 = vsyncadd [#allocation3], %s213
      %s215 = sshll.u32 [#allocation2], 4
      %s216 = int_to_ptr.vmem [resolvable:$true] %s215
      %221 = dma.vmem_to_hbm [thread:$0]  %s216, 256, %s5, [#allocation3], 128, 128, 8
    $region25: #{tpu_custom_call.1} parent=1 // pred_fallthru
      _
    // Predicated region
    $region26: #{tpu_custom_call.1} parent=1 // pred_check
      _
    $region27: #{tpu_custom_call.1} parent=1 // pred_check_branch
      %223 = sbr.rel (0) target = $region29
    $region28: #{tpu_custom_call.1} parent=1 // pred_region
      %224 = dma.done [#allocation3], 256
    $region29: #{tpu_custom_call.1} parent=1 // pred_fallthru
      _
    %225 = vsyncpa [#allocation3], 1

</llo_original>
